<compile_context>
chip_gen: v5e
topology: v5e:2x2
jax: 0.10.0
libtpu: 0.0.40
codegen_flags: <defaults>
</compile_context>

<pallas_src>
import jax
import jax.numpy as jnp
from jax.experimental import pallas as pl
from jax.experimental.pallas import tpu as pltpu


def _pfn_kernel(xh_ref, cin_ref, wg_ref, bg_ref, wt_ref, bt_ref, tri_ref,
                hout_ref, cout_ref, hner_ref, hre_ref, hshare_ref):
    tb = xh_ref.shape[0]
    xh = xh_ref[...]                          # (tb, F)  bf16
    c_in = cin_ref[...].astype(jnp.float32)   # (tb, H)  f32

    # Per-gate fused (input|hidden) matmuls: bf16 operands, f32 accumulation.
    def gate(k):
        return (jnp.dot(xh, wg_ref[k], preferred_element_type=jnp.float32)
                + bg_ref[k])

    c_gate = gate(0)                                                   # (tb, H)
    z = jnp.concatenate([gate(1), gate(2), gate(3), gate(4)], axis=0)  # (4tb, H)

    # cummax = cumsum(softmax(z, -1), -1): one batched triangular matmul (MXU)
    # over the four gate blocks instead of four lane-serial scans.
    m = jnp.max(z, axis=-1, keepdims=True)
    e = jnp.exp(z - m)
    total = jnp.sum(e, axis=-1, keepdims=True)
    cs = jnp.dot(e, tri_ref[...], preferred_element_type=jnp.float32)
    cm = cs * pl.reciprocal(total, approx=True)                        # (4tb, H)

    eg_cin = 1.0 - cm[0 * tb:1 * tb]
    rg_cin = cm[1 * tb:2 * tb]
    eg_c = 1.0 - cm[2 * tb:3 * tb]
    rg_c = cm[3 * tb:4 * tb]
    c = jnp.tanh(c_gate)

    overlap_c = rg_c * eg_c
    upper_c = rg_c - overlap_c
    downer_c = eg_c - overlap_c
    overlap_cin = rg_cin * eg_cin
    upper_cin = rg_cin - overlap_cin
    downer_cin = eg_cin - overlap_cin

    share = overlap_cin * c_in + overlap_c * c
    c_re = upper_cin * c_in + upper_c * c + share
    c_ner = downer_cin * c_in + downer_c * c + share
    c_share = share

    hre_ref[...] = jnp.tanh(c_re).astype(hre_ref.dtype)
    hner_ref[...] = jnp.tanh(c_ner).astype(hner_ref.dtype)
    hshare_ref[...] = jnp.tanh(c_share).astype(hshare_ref.dtype)

    # transform(cat(c_re, c_ner, c_share)) without materializing a (tb, 3H) concat.
    bf16 = jnp.bfloat16
    c_out = (jnp.dot(c_re.astype(bf16), wt_ref[0], preferred_element_type=jnp.float32)
             + jnp.dot(c_ner.astype(bf16), wt_ref[1], preferred_element_type=jnp.float32)
             + jnp.dot(c_share.astype(bf16), wt_ref[2], preferred_element_type=jnp.float32)
             + bt_ref[...])
    cout_ref[...] = c_out.astype(cout_ref.dtype)
    hout_ref[...] = jnp.tanh(c_out).astype(hout_ref.dtype)


def _round_up(n, m):
    return ((n + m - 1) // m) * m


def pfn_unit_forward(x, h_in, c_in, params, *, hidden_size, tile_b=256):
    """Returns ((h_out, c_out), (h_ner, h_re, h_share)) like the PyTorch module."""
    B, in_size = x.shape
    H = hidden_size
    F = in_size + H

    # ---- weight prep (glue, not hot path) --------------------------------
    wi = params["w_input"]                                        # (5H, in)
    wh = params["w_hidden"] * (1.0 - params["dropconnect"])       # (5H, H), eval DropConnect
    w_full = jnp.concatenate([wi, wh], axis=1)                    # (5H, F)
    wg = w_full.reshape(5, H, F).transpose(0, 2, 1).astype(jnp.bfloat16)   # (5, F, H)
    bg = (params["b_input"] + params["b_hidden"]).reshape(5, 1, H).astype(jnp.float32)
    wt = params["w_transform"].T.reshape(3, H, H).astype(jnp.bfloat16)     # (3, H, H)
    bt = params["b_transform"].reshape(1, H).astype(jnp.float32)
    tri = jnp.triu(jnp.ones((H, H), jnp.float32))                 # cumsum operator

    # ---- activation prep: fuse x|h_in on the feature axis, pad batch ------
    xh = jnp.concatenate([x, h_in], axis=-1)
    tb = tile_b if B >= tile_b else _round_up(B, 8)
    Bp = _round_up(B, tb)
    if Bp != B:
        xh = jnp.pad(xh, ((0, Bp - B), (0, 0)))
        c_in_p = jnp.pad(c_in, ((0, Bp - B), (0, 0)))
    else:
        c_in_p = c_in
    xh = xh.astype(jnp.bfloat16)

    grid = (Bp // tb,)
    act_in = lambda last: pl.BlockSpec((tb, last), lambda i: (i, 0))
    resident3 = lambda s: pl.BlockSpec(s, lambda i: (0, 0, 0))
    resident2 = lambda s: pl.BlockSpec(s, lambda i: (0, 0))

    out_sds = jax.ShapeDtypeStruct((Bp, H), jnp.float32)
    cost = pl.CostEstimate(
        flops=2 * Bp * F * 5 * H + 2 * 4 * Bp * H * H + 2 * Bp * 3 * H * H,
        transcendentals=9 * Bp * H,
        bytes_accessed=(xh.size * 2 + c_in_p.size * 4 + wg.size * 2 + bg.size * 4
                        + wt.size * 2 + bt.size * 4 + tri.size * 4 + 5 * Bp * H * 4),
    )

    outs = pl.pallas_call(
        _pfn_kernel,
        out_shape=(out_sds,) * 5,          # h_out, c_out, h_ner, h_re, h_share
        grid=grid,
        in_specs=[
            act_in(F),                     # xh      (streamed per batch tile)
            act_in(H),                     # c_in    (streamed per batch tile)
            resident3((5, F, H)),          # fused per-gate weights (resident)
            resident3((5, 1, H)),          # fused per-gate biases  (resident)
            resident3((3, H, H)),          # transform weight, split (resident)
            resident2((1, H)),             # transform bias          (resident)
            resident2((H, H)),             # triangular cumsum operator
        ],
        out_specs=tuple(pl.BlockSpec((tb, H), lambda i: (i, 0)) for _ in range(5)),
        compiler_params=pltpu.CompilerParams(
            dimension_semantics=("parallel",)),
        cost_estimate=cost,
    )(xh, c_in_p, wg, bg, wt, bt, tri)

    h_out, c_out, h_ner, h_re, h_share = (o[:B] for o in outs)
    return (h_out, c_out), (h_ner, h_re, h_share)


def _reference(x, h_in, c_in, params, hidden_size):
    H = hidden_size
    wi, bi = params["w_input"], params["b_input"]
    wh, bh = params["w_hidden"] * (1.0 - params["dropconnect"]), params["b_hidden"]
    wt, bt = params["w_transform"], params["b_transform"]

    def cummax(z):
        return jnp.cumsum(jax.nn.softmax(z, axis=-1), axis=-1)

    gates = x @ wi.T + bi + h_in @ wh.T + bh
    c, eg_cin, rg_cin, eg_c, rg_c = [gates[:, i * H:(i + 1) * H] for i in range(5)]
    eg_cin, rg_cin = 1 - cummax(eg_cin), cummax(rg_cin)
    eg_c, rg_c = 1 - cummax(eg_c), cummax(rg_c)
    c = jnp.tanh(c)
    ov_c, up_c, dn_c = rg_c * eg_c, rg_c - rg_c * eg_c, eg_c - rg_c * eg_c
    ov_i, up_i, dn_i = rg_cin * eg_cin, rg_cin - rg_cin * eg_cin, eg_cin - rg_cin * eg_cin
    share = ov_i * c_in + ov_c * c
    c_re = up_i * c_in + up_c * c + share
    c_ner = dn_i * c_in + dn_c * c + share
    c_share = share
    c_out = jnp.concatenate([c_re, c_ner, c_share], axis=-1) @ wt.T + bt
    return ((jnp.tanh(c_out), c_out),
            (jnp.tanh(c_ner), jnp.tanh(c_re), jnp.tanh(c_share)))


if __name__ == "__main__":
    B, INPUT_SIZE, HIDDEN = 2, 16, 32
    DROPCONNECT = 0.1

    key = jax.random.PRNGKey(0)
    ks = jax.random.split(key, 9)
    params = {
        "w_input":     0.1 * jax.random.normal(ks[0], (5 * HIDDEN, INPUT_SIZE), jnp.float32),
        "b_input":     0.1 * jax.random.normal(ks[1], (5 * HIDDEN,), jnp.float32),
        "w_hidden":    0.1 * jax.random.normal(ks[2], (5 * HIDDEN, HIDDEN), jnp.float32),
        "b_hidden":    0.1 * jax.random.normal(ks[3], (5 * HIDDEN,), jnp.float32),
        "w_transform": 0.1 * jax.random.normal(ks[4], (HIDDEN, 3 * HIDDEN), jnp.float32),
        "b_transform": 0.1 * jax.random.normal(ks[5], (HIDDEN,), jnp.float32),
        "dropconnect": DROPCONNECT,
    }
    x    = jax.random.normal(ks[6], (B, INPUT_SIZE), jnp.float32)
    h_in = jax.random.normal(ks[7], (B, HIDDEN), jnp.float32)
    c_in = jax.random.normal(ks[8], (B, HIDDEN), jnp.float32)

    (h_out, c_out), (h_ner, h_re, h_share) = pfn_unit_forward(
        x, h_in, c_in, params, hidden_size=HIDDEN)
    jax.block_until_ready((h_out, c_out, h_ner, h_re, h_share))

    (h_out_r, c_out_r), (h_ner_r, h_re_r, h_share_r) = _reference(
        x, h_in, c_in, params, HIDDEN)
    # bf16 matmul operands + approx reciprocal vs f32 reference -> loosened tol.
    for got, ref in [(h_out, h_out_r), (c_out, c_out_r),
                     (h_ner, h_ner_r), (h_re, h_re_r), (h_share, h_share_r)]:
        assert got.shape == ref.shape
        assert jnp.allclose(got, ref, atol=5e-2, rtol=5e-2), "mismatch vs reference"

    print("KERNEL_OK")
</pallas_src>

<mosaic_0001>
module attributes {stable_mosaic.version = 11 : i64} {
  func.func @_pfn_kernel(%arg0: i32, %arg1: memref<8x48xbf16, #tpu.memory_space<vmem>>, %arg2: memref<8x32xf32, #tpu.memory_space<vmem>>, %arg3: memref<5x48x32xbf16, #tpu.memory_space<vmem>>, %arg4: memref<5x1x32xf32, #tpu.memory_space<vmem>>, %arg5: memref<3x32x32xbf16, #tpu.memory_space<vmem>>, %arg6: memref<1x32xf32, #tpu.memory_space<vmem>>, %arg7: memref<32x32xf32, #tpu.memory_space<vmem>>, %arg8: memref<8x32xf32, #tpu.memory_space<vmem>>, %arg9: memref<8x32xf32, #tpu.memory_space<vmem>>, %arg10: memref<8x32xf32, #tpu.memory_space<vmem>>, %arg11: memref<8x32xf32, #tpu.memory_space<vmem>>, %arg12: memref<8x32xf32, #tpu.memory_space<vmem>>) attributes {dimension_semantics = [#tpu.dimension_semantics<parallel>], iteration_bounds = array<i64: 1>, scalar_prefetch = 0 : i64, scratch_operands = 0 : i64, tpu.core_type = #tpu.core_type<tc>, window_params = [{transform_indices = @transform_0, window_bounds = array<i64: 8, 48>}, {transform_indices = @transform_1, window_bounds = array<i64: 8, 32>}, {pipeline_mode = #tpu.pipeline_mode<synchronous>, transform_indices = @transform_2, window_bounds = array<i64: 5, 48, 32>}, {pipeline_mode = #tpu.pipeline_mode<synchronous>, transform_indices = @transform_3, window_bounds = array<i64: 5, 1, 32>}, {pipeline_mode = #tpu.pipeline_mode<synchronous>, transform_indices = @transform_4, window_bounds = array<i64: 3, 32, 32>}, {pipeline_mode = #tpu.pipeline_mode<synchronous>, transform_indices = @transform_5, window_bounds = array<i64: 1, 32>}, {pipeline_mode = #tpu.pipeline_mode<synchronous>, transform_indices = @transform_6, window_bounds = array<i64: 32, 32>}, {transform_indices = @transform_7, window_bounds = array<i64: 8, 32>}, {transform_indices = @transform_8, window_bounds = array<i64: 8, 32>}, {transform_indices = @transform_9, window_bounds = array<i64: 8, 32>}, {transform_indices = @transform_10, window_bounds = array<i64: 8, 32>}, {transform_indices = @transform_11, window_bounds = array<i64: 8, 32>}]} {
    %c0 = arith.constant 0 : index
    %c0_0 = arith.constant 0 : index
    %0 = vector.load %arg1[%c0, %c0_0] : memref<8x48xbf16, #tpu.memory_space<vmem>>, vector<8x48xbf16>
    %c0_1 = arith.constant 0 : index
    %c0_2 = arith.constant 0 : index
    %1 = vector.load %arg2[%c0_1, %c0_2] : memref<8x32xf32, #tpu.memory_space<vmem>>, vector<8x32xf32>
    %c0_3 = arith.constant 0 : index
    %c0_4 = arith.constant 0 : index
    %c0_5 = arith.constant 0 : index
    %2 = vector.load %arg3[%c0_3, %c0_4, %c0_5] : memref<5x48x32xbf16, #tpu.memory_space<vmem>>, vector<1x48x32xbf16>
    %3 = vector.shape_cast %2 : vector<1x48x32xbf16> to vector<48x32xbf16>
    %cst = arith.constant dense<0.000000e+00> : vector<8x32xf32>
    %4 = tpu.matmul %0, %3, %cst {dimension_numbers = #tpu.dot_dimension_numbers<[1], [0], [0], [1], [0, 0, 1, 1], [], []>} : vector<8x48xbf16>, vector<48x32xbf16>, vector<8x32xf32> -> vector<8x32xf32>
    %c0_6 = arith.constant 0 : index
    %c0_7 = arith.constant 0 : index
    %c0_8 = arith.constant 0 : index
    %5 = vector.load %arg4[%c0_6, %c0_7, %c0_8] : memref<5x1x32xf32, #tpu.memory_space<vmem>>, vector<1x1x32xf32>
    %6 = vector.shape_cast %5 : vector<1x1x32xf32> to vector<1x32xf32>
    %7 = vector.broadcast %6 : vector<1x32xf32> to vector<8x32xf32>
    %8 = arith.addf %4, %7 : vector<8x32xf32>
    %c1 = arith.constant 1 : index
    %c0_9 = arith.constant 0 : index
    %c0_10 = arith.constant 0 : index
    %9 = vector.load %arg3[%c1, %c0_9, %c0_10] : memref<5x48x32xbf16, #tpu.memory_space<vmem>>, vector<1x48x32xbf16>
    %10 = vector.shape_cast %9 : vector<1x48x32xbf16> to vector<48x32xbf16>
    %cst_11 = arith.constant dense<0.000000e+00> : vector<8x32xf32>
    %11 = tpu.matmul %0, %10, %cst_11 {dimension_numbers = #tpu.dot_dimension_numbers<[1], [0], [0], [1], [0, 0, 1, 1], [], []>} : vector<8x48xbf16>, vector<48x32xbf16>, vector<8x32xf32> -> vector<8x32xf32>
    %c1_12 = arith.constant 1 : index
    %c0_13 = arith.constant 0 : index
    %c0_14 = arith.constant 0 : index
    %12 = vector.load %arg4[%c1_12, %c0_13, %c0_14] : memref<5x1x32xf32, #tpu.memory_space<vmem>>, vector<1x1x32xf32>
    %13 = vector.shape_cast %12 : vector<1x1x32xf32> to vector<1x32xf32>
    %14 = vector.broadcast %13 : vector<1x32xf32> to vector<8x32xf32>
    %15 = arith.addf %11, %14 : vector<8x32xf32>
    %c2 = arith.constant 2 : index
    %c0_15 = arith.constant 0 : index
    %c0_16 = arith.constant 0 : index
    %16 = vector.load %arg3[%c2, %c0_15, %c0_16] : memref<5x48x32xbf16, #tpu.memory_space<vmem>>, vector<1x48x32xbf16>
    %17 = vector.shape_cast %16 : vector<1x48x32xbf16> to vector<48x32xbf16>
    %cst_17 = arith.constant dense<0.000000e+00> : vector<8x32xf32>
    %18 = tpu.matmul %0, %17, %cst_17 {dimension_numbers = #tpu.dot_dimension_numbers<[1], [0], [0], [1], [0, 0, 1, 1], [], []>} : vector<8x48xbf16>, vector<48x32xbf16>, vector<8x32xf32> -> vector<8x32xf32>
    %c2_18 = arith.constant 2 : index
    %c0_19 = arith.constant 0 : index
    %c0_20 = arith.constant 0 : index
    %19 = vector.load %arg4[%c2_18, %c0_19, %c0_20] : memref<5x1x32xf32, #tpu.memory_space<vmem>>, vector<1x1x32xf32>
    %20 = vector.shape_cast %19 : vector<1x1x32xf32> to vector<1x32xf32>
    %21 = vector.broadcast %20 : vector<1x32xf32> to vector<8x32xf32>
    %22 = arith.addf %18, %21 : vector<8x32xf32>
    %c3 = arith.constant 3 : index
    %c0_21 = arith.constant 0 : index
    %c0_22 = arith.constant 0 : index
    %23 = vector.load %arg3[%c3, %c0_21, %c0_22] : memref<5x48x32xbf16, #tpu.memory_space<vmem>>, vector<1x48x32xbf16>
    %24 = vector.shape_cast %23 : vector<1x48x32xbf16> to vector<48x32xbf16>
    %cst_23 = arith.constant dense<0.000000e+00> : vector<8x32xf32>
    %25 = tpu.matmul %0, %24, %cst_23 {dimension_numbers = #tpu.dot_dimension_numbers<[1], [0], [0], [1], [0, 0, 1, 1], [], []>} : vector<8x48xbf16>, vector<48x32xbf16>, vector<8x32xf32> -> vector<8x32xf32>
    %c3_24 = arith.constant 3 : index
    %c0_25 = arith.constant 0 : index
    %c0_26 = arith.constant 0 : index
    %26 = vector.load %arg4[%c3_24, %c0_25, %c0_26] : memref<5x1x32xf32, #tpu.memory_space<vmem>>, vector<1x1x32xf32>
    %27 = vector.shape_cast %26 : vector<1x1x32xf32> to vector<1x32xf32>
    %28 = vector.broadcast %27 : vector<1x32xf32> to vector<8x32xf32>
    %29 = arith.addf %25, %28 : vector<8x32xf32>
    %c4 = arith.constant 4 : index
    %c0_27 = arith.constant 0 : index
    %c0_28 = arith.constant 0 : index
    %30 = vector.load %arg3[%c4, %c0_27, %c0_28] : memref<5x48x32xbf16, #tpu.memory_space<vmem>>, vector<1x48x32xbf16>
    %31 = vector.shape_cast %30 : vector<1x48x32xbf16> to vector<48x32xbf16>
    %cst_29 = arith.constant dense<0.000000e+00> : vector<8x32xf32>
    %32 = tpu.matmul %0, %31, %cst_29 {dimension_numbers = #tpu.dot_dimension_numbers<[1], [0], [0], [1], [0, 0, 1, 1], [], []>} : vector<8x48xbf16>, vector<48x32xbf16>, vector<8x32xf32> -> vector<8x32xf32>
    %c4_30 = arith.constant 4 : index
    %c0_31 = arith.constant 0 : index
    %c0_32 = arith.constant 0 : index
    %33 = vector.load %arg4[%c4_30, %c0_31, %c0_32] : memref<5x1x32xf32, #tpu.memory_space<vmem>>, vector<1x1x32xf32>
    %34 = vector.shape_cast %33 : vector<1x1x32xf32> to vector<1x32xf32>
    %35 = vector.broadcast %34 : vector<1x32xf32> to vector<8x32xf32>
    %36 = arith.addf %32, %35 : vector<8x32xf32>
    %37 = tpu.concatenate %15, %22, %29, %36 in 0 : vector<8x32xf32>, vector<8x32xf32>, vector<8x32xf32>, vector<8x32xf32> -> vector<32x32xf32>
    %cst_33 = arith.constant dense<0xFF800000> : vector<32xf32>
    %38 = vector.multi_reduction <maximumf>, %37, %cst_33 [1] : vector<32x32xf32> to vector<32xf32>
    %39 = vector.shape_cast %38 : vector<32xf32> to vector<32x1xf32>
    %40 = vector.broadcast %39 : vector<32x1xf32> to vector<32x32xf32>
    %41 = arith.subf %37, %40 : vector<32x32xf32>
    %42 = math.exp %41 : vector<32x32xf32>
    %cst_34 = arith.constant dense<0.000000e+00> : vector<32xf32>
    %43 = vector.multi_reduction <add>, %42, %cst_34 [1] : vector<32x32xf32> to vector<32xf32>
    %44 = vector.shape_cast %43 : vector<32xf32> to vector<32x1xf32>
    %c0_35 = arith.constant 0 : index
    %c0_36 = arith.constant 0 : index
    %45 = vector.load %arg7[%c0_35, %c0_36] : memref<32x32xf32, #tpu.memory_space<vmem>>, vector<32x32xf32>
    %cst_37 = arith.constant dense<0.000000e+00> : vector<32x32xf32>
    %46 = tpu.matmul %42, %45, %cst_37 {dimension_numbers = #tpu.dot_dimension_numbers<[1], [0], [0], [1], [0, 0, 1, 1], [], []>} : vector<32x32xf32>, vector<32x32xf32>, vector<32x32xf32> -> vector<32x32xf32>
    %47 = tpu.reciprocal %44 {approx = true} : vector<32x1xf32> -> vector<32x1xf32>
    %48 = vector.broadcast %47 : vector<32x1xf32> to vector<32x32xf32>
    %49 = arith.mulf %46, %48 : vector<32x32xf32>
    %50 = vector.extract_strided_slice %49 {offsets = [0, 0], sizes = [8, 32], strides = [1, 1]} : vector<32x32xf32> to vector<8x32xf32>
    %cst_38 = arith.constant 1.000000e+00 : f32
    %51 = vector.broadcast %cst_38 : f32 to vector<8x32xf32>
    %52 = arith.subf %51, %50 : vector<8x32xf32>
    %53 = vector.extract_strided_slice %49 {offsets = [8, 0], sizes = [8, 32], strides = [1, 1]} : vector<32x32xf32> to vector<8x32xf32>
    %54 = vector.extract_strided_slice %49 {offsets = [16, 0], sizes = [8, 32], strides = [1, 1]} : vector<32x32xf32> to vector<8x32xf32>
    %cst_39 = arith.constant 1.000000e+00 : f32
    %55 = vector.broadcast %cst_39 : f32 to vector<8x32xf32>
    %56 = arith.subf %55, %54 : vector<8x32xf32>
    %57 = vector.extract_strided_slice %49 {offsets = [24, 0], sizes = [8, 32], strides = [1, 1]} : vector<32x32xf32> to vector<8x32xf32>
    %58 = math.tanh %8 : vector<8x32xf32>
    %59 = arith.mulf %57, %56 : vector<8x32xf32>
    %60 = arith.subf %57, %59 : vector<8x32xf32>
    %61 = arith.subf %56, %59 : vector<8x32xf32>
    %62 = arith.mulf %53, %52 : vector<8x32xf32>
    %63 = arith.subf %53, %62 : vector<8x32xf32>
    %64 = arith.subf %52, %62 : vector<8x32xf32>
    %65 = arith.mulf %62, %1 : vector<8x32xf32>
    %66 = arith.mulf %59, %58 : vector<8x32xf32>
    %67 = arith.addf %65, %66 : vector<8x32xf32>
    %68 = arith.mulf %63, %1 : vector<8x32xf32>
    %69 = arith.mulf %60, %58 : vector<8x32xf32>
    %70 = arith.addf %68, %69 : vector<8x32xf32>
    %71 = arith.addf %70, %67 : vector<8x32xf32>
    %72 = arith.mulf %64, %1 : vector<8x32xf32>
    %73 = arith.mulf %61, %58 : vector<8x32xf32>
    %74 = arith.addf %72, %73 : vector<8x32xf32>
    %75 = arith.addf %74, %67 : vector<8x32xf32>
    %76 = math.tanh %71 : vector<8x32xf32>
    %c0_40 = arith.constant 0 : index
    %c0_41 = arith.constant 0 : index
    %77 = vector.load %arg11[%c0_40, %c0_41] : memref<8x32xf32, #tpu.memory_space<vmem>>, vector<8x32xf32>
    tpu.vector_store %arg11[%c0_40, %c0_41], %76 {strides = array<i32>} : memref<8x32xf32, #tpu.memory_space<vmem>>, vector<8x32xf32>,
    %78 = math.tanh %75 : vector<8x32xf32>
    %c0_42 = arith.constant 0 : index
    %c0_43 = arith.constant 0 : index
    %79 = vector.load %arg10[%c0_42, %c0_43] : memref<8x32xf32, #tpu.memory_space<vmem>>, vector<8x32xf32>
    tpu.vector_store %arg10[%c0_42, %c0_43], %78 {strides = array<i32>} : memref<8x32xf32, #tpu.memory_space<vmem>>, vector<8x32xf32>,
    %80 = math.tanh %67 : vector<8x32xf32>
    %c0_44 = arith.constant 0 : index
    %c0_45 = arith.constant 0 : index
    %81 = vector.load %arg12[%c0_44, %c0_45] : memref<8x32xf32, #tpu.memory_space<vmem>>, vector<8x32xf32>
    tpu.vector_store %arg12[%c0_44, %c0_45], %80 {strides = array<i32>} : memref<8x32xf32, #tpu.memory_space<vmem>>, vector<8x32xf32>,
    %82 = arith.truncf %71 : vector<8x32xf32> to vector<8x32xbf16>
    %c0_46 = arith.constant 0 : index
    %c0_47 = arith.constant 0 : index
    %c0_48 = arith.constant 0 : index
    %83 = vector.load %arg5[%c0_46, %c0_47, %c0_48] : memref<3x32x32xbf16, #tpu.memory_space<vmem>>, vector<1x32x32xbf16>
    %84 = vector.shape_cast %83 : vector<1x32x32xbf16> to vector<32x32xbf16>
    %cst_49 = arith.constant dense<0.000000e+00> : vector<8x32xf32>
    %85 = tpu.matmul %82, %84, %cst_49 {dimension_numbers = #tpu.dot_dimension_numbers<[1], [0], [0], [1], [0, 0, 1, 1], [], []>} : vector<8x32xbf16>, vector<32x32xbf16>, vector<8x32xf32> -> vector<8x32xf32>
    %86 = arith.truncf %75 : vector<8x32xf32> to vector<8x32xbf16>
    %c1_50 = arith.constant 1 : index
    %c0_51 = arith.constant 0 : index
    %c0_52 = arith.constant 0 : index
    %87 = vector.load %arg5[%c1_50, %c0_51, %c0_52] : memref<3x32x32xbf16, #tpu.memory_space<vmem>>, vector<1x32x32xbf16>
    %88 = vector.shape_cast %87 : vector<1x32x32xbf16> to vector<32x32xbf16>
    %cst_53 = arith.constant dense<0.000000e+00> : vector<8x32xf32>
    %89 = tpu.matmul %86, %88, %cst_53 {dimension_numbers = #tpu.dot_dimension_numbers<[1], [0], [0], [1], [0, 0, 1, 1], [], []>} : vector<8x32xbf16>, vector<32x32xbf16>, vector<8x32xf32> -> vector<8x32xf32>
    %90 = arith.addf %85, %89 : vector<8x32xf32>
    %91 = arith.truncf %67 : vector<8x32xf32> to vector<8x32xbf16>
    %c2_54 = arith.constant 2 : index
    %c0_55 = arith.constant 0 : index
    %c0_56 = arith.constant 0 : index
    %92 = vector.load %arg5[%c2_54, %c0_55, %c0_56] : memref<3x32x32xbf16, #tpu.memory_space<vmem>>, vector<1x32x32xbf16>
    %93 = vector.shape_cast %92 : vector<1x32x32xbf16> to vector<32x32xbf16>
    %cst_57 = arith.constant dense<0.000000e+00> : vector<8x32xf32>
    %94 = tpu.matmul %91, %93, %cst_57 {dimension_numbers = #tpu.dot_dimension_numbers<[1], [0], [0], [1], [0, 0, 1, 1], [], []>} : vector<8x32xbf16>, vector<32x32xbf16>, vector<8x32xf32> -> vector<8x32xf32>
    %95 = arith.addf %90, %94 : vector<8x32xf32>
    %c0_58 = arith.constant 0 : index
    %c0_59 = arith.constant 0 : index
    %96 = vector.load %arg6[%c0_58, %c0_59] : memref<1x32xf32, #tpu.memory_space<vmem>>, vector<1x32xf32>
    %97 = vector.broadcast %96 : vector<1x32xf32> to vector<8x32xf32>
    %98 = arith.addf %95, %97 : vector<8x32xf32>
    %c0_60 = arith.constant 0 : index
    %c0_61 = arith.constant 0 : index
    %99 = vector.load %arg9[%c0_60, %c0_61] : memref<8x32xf32, #tpu.memory_space<vmem>>, vector<8x32xf32>
    tpu.vector_store %arg9[%c0_60, %c0_61], %98 {strides = array<i32>} : memref<8x32xf32, #tpu.memory_space<vmem>>, vector<8x32xf32>,
    %100 = math.tanh %98 : vector<8x32xf32>
    %c0_62 = arith.constant 0 : index
    %c0_63 = arith.constant 0 : index
    %101 = vector.load %arg8[%c0_62, %c0_63] : memref<8x32xf32, #tpu.memory_space<vmem>>, vector<8x32xf32>
    tpu.vector_store %arg8[%c0_62, %c0_63], %100 {strides = array<i32>} : memref<8x32xf32, #tpu.memory_space<vmem>>, vector<8x32xf32>,
    return
  }
  func.func @transform_0(%arg0: i32) -> (i32, i32) {
    %c0_i32 = arith.constant 0 : i32
    %c0_i32_0 = arith.constant 0 : i32
    return %arg0, %c0_i32 : i32, i32
  }
  func.func @transform_1(%arg0: i32) -> (i32, i32) {
    %c0_i32 = arith.constant 0 : i32
    %c0_i32_0 = arith.constant 0 : i32
    return %arg0, %c0_i32 : i32, i32
  }
  func.func @transform_2(%arg0: i32) -> (i32, i32, i32) {
    %c0_i32 = arith.constant 0 : i32
    %c0_i32_0 = arith.constant 0 : i32
    %c0_i32_1 = arith.constant 0 : i32
    %c0_i32_2 = arith.constant 0 : i32
    return %c0_i32, %c0_i32_0, %c0_i32_1 : i32, i32, i32
  }
  func.func @transform_3(%arg0: i32) -> (i32, i32, i32) {
    %c0_i32 = arith.constant 0 : i32
    %c0_i32_0 = arith.constant 0 : i32
    %c0_i32_1 = arith.constant 0 : i32
    %c0_i32_2 = arith.constant 0 : i32
    return %c0_i32, %c0_i32_0, %c0_i32_1 : i32, i32, i32
  }
  func.func @transform_4(%arg0: i32) -> (i32, i32, i32) {
    %c0_i32 = arith.constant 0 : i32
    %c0_i32_0 = arith.constant 0 : i32
    %c0_i32_1 = arith.constant 0 : i32
    %c0_i32_2 = arith.constant 0 : i32
    return %c0_i32, %c0_i32_0, %c0_i32_1 : i32, i32, i32
  }
  func.func @transform_5(%arg0: i32) -> (i32, i32) {
    %c0_i32 = arith.constant 0 : i32
    %c0_i32_0 = arith.constant 0 : i32
    %c0_i32_1 = arith.constant 0 : i32
    return %c0_i32, %c0_i32_0 : i32, i32
  }
  func.func @transform_6(%arg0: i32) -> (i32, i32) {
    %c0_i32 = arith.constant 0 : i32
    %c0_i32_0 = arith.constant 0 : i32
    %c0_i32_1 = arith.constant 0 : i32
    return %c0_i32, %c0_i32_0 : i32, i32
  }
  func.func @transform_7(%arg0: i32) -> (i32, i32) {
    %c0_i32 = arith.constant 0 : i32
    %c0_i32_0 = arith.constant 0 : i32
    return %arg0, %c0_i32 : i32, i32
  }
  func.func @transform_8(%arg0: i32) -> (i32, i32) {
    %c0_i32 = arith.constant 0 : i32
    %c0_i32_0 = arith.constant 0 : i32
    return %arg0, %c0_i32 : i32, i32
  }
  func.func @transform_9(%arg0: i32) -> (i32, i32) {
    %c0_i32 = arith.constant 0 : i32
    %c0_i32_0 = arith.constant 0 : i32
    return %arg0, %c0_i32 : i32, i32
  }
  func.func @transform_10(%arg0: i32) -> (i32, i32) {
    %c0_i32 = arith.constant 0 : i32
    %c0_i32_0 = arith.constant 0 : i32
    return %arg0, %c0_i32 : i32, i32
  }
  func.func @transform_11(%arg0: i32) -> (i32, i32) {
    %c0_i32 = arith.constant 0 : i32
    %c0_i32_0 = arith.constant 0 : i32
    return %arg0, %c0_i32 : i32, i32
  }
}

</mosaic_0001>

<llo_original>
// kernel: tpu_custom_call.1
$region0: #{tpu_custom_call.1}
  #allocation0 [shape = 'u32[]', space=smem, size = 0x4, offset = 0x4, fixed_abs, tag = 'smem constant byte address 0x4 - core index']
  #allocation1 [shape = 'u32[72,128]{1,0:T(1,128)}', space=vmem, size = 0x9000, scoped, tag = 'internal scratch']
  %s0 = inlined_call_operand.vmem [shape: bf16[8,48], index: 0, kind: input, shape index: {}]
  %s1 = inlined_call_operand.vmem [shape: f32[8,32], index: 1, kind: input, shape index: {}]
  %s2 = inlined_call_operand.vmem [shape: bf16[5,48,32], index: 2, kind: input, shape index: {}]
  %s3 = inlined_call_operand.vmem [shape: f32[5,1,32], index: 3, kind: input, shape index: {}]
  %s4 = inlined_call_operand.vmem [shape: bf16[3,32,32], index: 4, kind: input, shape index: {}]
  %s5 = inlined_call_operand.vmem [shape: f32[1,32], index: 5, kind: input, shape index: {}]
  %s6 = inlined_call_operand.vmem [shape: f32[32,32], index: 6, kind: input, shape index: {}]
  %s7 = inlined_call_operand.hbm [shape: f32[8,32], index: 7, kind: output, shape index: {0}]
  %s8 = inlined_call_operand.hbm [shape: f32[8,32], index: 8, kind: output, shape index: {1}]
  %s9 = inlined_call_operand.hbm [shape: f32[8,32], index: 9, kind: output, shape index: {2}]
  %s10 = inlined_call_operand.hbm [shape: f32[8,32], index: 10, kind: output, shape index: {3}]
  %s11 = inlined_call_operand.hbm [shape: f32[8,32], index: 11, kind: output, shape index: {4}]
  %12 = xla_tuple %s7, %s8, %s9, %s10, %s11
  %s13 = sld [smem:[#allocation0]]
  $region70: #{tpu_custom_call.1} parent=0
    _
  %s15 = ssub.s32 1, %s13
  %s16 = scalar_select 0, %s15, %s13
  $region1: #{tpu_custom_call.1} parent=0
    #allocation2 [shape = 'u8[4096]{0}', space=vmem, size = 0x1000, scoped, tag = 'output window, operand 0, single buffered']
    #allocation3 [shape = 's32[1]{0}', space=sflag, size = 0x4, scoped, tag = 'scoped memory for tpu_custom_call.1']
    #allocation4 [shape = 'u8[4096]{0}', space=vmem, size = 0x1000, scoped, tag = 'output window, operand 1, single buffered']
    #allocation5 [shape = 's32[1]{0}', space=sflag, size = 0x4, scoped, tag = 'scoped memory for tpu_custom_call.1']
    #allocation6 [shape = 'u8[4096]{0}', space=vmem, size = 0x1000, scoped, tag = 'output window, operand 2, single buffered']
    #allocation7 [shape = 'u8[4096]{0}', space=vmem, size = 0x1000, scoped, tag = 'output window, operand 3, single buffered']
    #allocation8 [shape = 's32[1]{0}', space=sflag, size = 0x4, scoped, tag = 'scoped memory for tpu_custom_call.1']
    #allocation9 [shape = 'u8[4096]{0}', space=vmem, size = 0x1000, scoped, tag = 'output window, operand 4, single buffered']
    %17 = vsyncpa [#allocation3], 0
    %18 = vsyncpa [#allocation5], 0
    %19 = vsyncpa [#allocation8], 0
    // Predicated region
    $region2: #{tpu_custom_call.1} parent=1 // pred_check
      _
    $region3: #{tpu_custom_call.1} parent=1 // pred_check_branch
      %21 = sbr.rel (0) target = $region5
    $region4: #{tpu_custom_call.1} parent=1 // pred_region
      _
    $region5: #{tpu_custom_call.1} parent=1 // pred_fallthru
      _
    // Predicated region
    $region6: #{tpu_custom_call.1} parent=1 // pred_check
      _
    $region7: #{tpu_custom_call.1} parent=1 // pred_check_branch
      %23 = sbr.rel (0) target = $region9
    $region8: #{tpu_custom_call.1} parent=1 // pred_region
      _
    $region9: #{tpu_custom_call.1} parent=1 // pred_fallthru
      _
    // Predicated region
    $region10: #{tpu_custom_call.1} parent=1 // pred_check
      _
    $region11: #{tpu_custom_call.1} parent=1 // pred_check_branch
      %25 = sbr.rel (0) target = $region13
    $region12: #{tpu_custom_call.1} parent=1 // pred_region
      _
    $region13: #{tpu_custom_call.1} parent=1 // pred_fallthru
      _
    // Predicated region
    $region14: #{tpu_custom_call.1} parent=1 // pred_check
      _
    $region15: #{tpu_custom_call.1} parent=1 // pred_check_branch
      %27 = sbr.rel (0) target = $region17
    $region16: #{tpu_custom_call.1} parent=1 // pred_region
      _
    $region17: #{tpu_custom_call.1} parent=1 // pred_fallthru
      _
    // Predicated region
    $region18: #{tpu_custom_call.1} parent=1 // pred_check
      _
    $region19: #{tpu_custom_call.1} parent=1 // pred_check_branch
      %29 = sbr.rel (0) target = $region21
    $region20: #{tpu_custom_call.1} parent=1 // pred_region
      _
    $region21: #{tpu_custom_call.1} parent=1 // pred_fallthru
      _
    // Predicated region
    $region22: #{tpu_custom_call.1} parent=1 // pred_check
      _
    $region23: #{tpu_custom_call.1} parent=1 // pred_check_branch
      %31 = sbr.rel (0) target = $region25
    $region24: #{tpu_custom_call.1} parent=1 // pred_region
      _
    $region25: #{tpu_custom_call.1} parent=1 // pred_fallthru
      _
    // Predicated region
    $region26: #{tpu_custom_call.1} parent=1 // pred_check
      _
    $region27: #{tpu_custom_call.1} parent=1 // pred_check_branch
      %33 = sbr.rel (0) target = $region29
    $region28: #{tpu_custom_call.1} parent=1 // pred_region
      _
    $region29: #{tpu_custom_call.1} parent=1 // pred_fallthru
      _
    %v35 = vld [vmem:[%s0] sm:$0xf]
    %v36 = vld [vmem:[%s1] sm:$0xff]
    %v37 = vld [vmem:[%s2] sm:$0xf]
    %v38 = vld [vmem:[%s2 + $0x4] sm:$0xf]
    %v39 = vld [vmem:[%s2 + $0x8] sm:$0xf]
    %v40 = vld [vmem:[%s2 + $0xc] sm:$0xf]
    %v41 = vld [vmem:[%s2 + $0x10] sm:$0xf]
    %v42 = vld [vmem:[%s2 + $0x14] sm:$0xf]
    %v43 = vld [vmem:[%s3] sm:$0x1]
    %v45 = vperm.slane %v43, 0
    %v53 = vunpack.c.l.b16 %v37
    %v54 = vunpack.c.l.b16 %v38
    %v55 = vunpack.c.l.b16 %v39
    %v56 = vunpack.c.l.b16 %v40
    %v57 = vunpack.c.l.b16 %v41
    %v58 = vunpack.c.l.b16 %v42
    %v59 = vpack.c.b16 %v54, %v53
    %v60 = vpack.c.b16 %v56, %v55
    %v61 = vpack.c.b16 %v58, %v57
    %vm65 = vcmask 392192
    %v67 = vsel %vm65, %v35, 0
    %69 = vmatpush.bf16.msra.mxu0 0
    %70 = vmatpush.bf16.msra.mxu0 0
    %71 = vmatpush.bf16.msra.mxu0 0
    %72 = vmatpush.bf16.msra.mxu0 0
    %73 = vmatpush.bf16.msra.mxu0 0
    %74 = vmatpush.bf16.msra.mxu0 %v61
    %75 = vmatpush.bf16.msra.mxu0 %v60
    %76 = vmatpush.bf16.msra.mxu0 %v59
    %77 = vmatmul.bf16.gmra.mxu0 %v67
    %v78 = vpop.f32.mrf.mxu0
    %v79 = vadd.f32 %v45, %v78
    %v80 = vpop.f32.mrf.mxu0
    %81 = vdwg.mxu0
    %s82 = scalar_lea.vmem %s2, 24
    %v83 = vld [vmem:[%s82] sm:$0xf]
    %v84 = vld [vmem:[%s82 + $0x4] sm:$0xf]
    %v85 = vld [vmem:[%s82 + $0x8] sm:$0xf]
    %v86 = vld [vmem:[%s82 + $0xc] sm:$0xf]
    %v87 = vld [vmem:[%s82 + $0x10] sm:$0xf]
    %v88 = vld [vmem:[%s82 + $0x14] sm:$0xf]
    %s89 = scalar_lea.vmem %s3, 1
    %v90 = vld [vmem:[%s89] sm:$0x1]
    %v92 = vperm.slane %v90, 0
    %v100 = vunpack.c.l.b16 %v83
    %v101 = vunpack.c.l.b16 %v84
    %v102 = vunpack.c.l.b16 %v85
    %v103 = vunpack.c.l.b16 %v86
    %v104 = vunpack.c.l.b16 %v87
    %v105 = vunpack.c.l.b16 %v88
    %v106 = vpack.c.b16 %v101, %v100
    %v107 = vpack.c.b16 %v103, %v102
    %v108 = vpack.c.b16 %v105, %v104
    %112 = vmatpush.bf16.msra.mxu0 0
    %113 = vmatpush.bf16.msra.mxu0 0
    %114 = vmatpush.bf16.msra.mxu0 0
    %115 = vmatpush.bf16.msra.mxu0 0
    %116 = vmatpush.bf16.msra.mxu0 0
    %117 = vmatpush.bf16.msra.mxu0 %v108
    %118 = vmatpush.bf16.msra.mxu0 %v107
    %119 = vmatpush.bf16.msra.mxu0 %v106
    %120 = vmatmul.bf16.gmra.mxu0 %v67
    %v121 = vpop.f32.mrf.mxu0
    %v122 = vadd.f32 %v92, %v121
    %v123 = vpop.f32.mrf.mxu0
    %124 = vdwg.mxu0
    %s125 = scalar_lea.vmem %s2, 48
    %v126 = vld [vmem:[%s125] sm:$0xf]
    %v127 = vld [vmem:[%s125 + $0x4] sm:$0xf]
    %v128 = vld [vmem:[%s125 + $0x8] sm:$0xf]
    %v129 = vld [vmem:[%s125 + $0xc] sm:$0xf]
    %v130 = vld [vmem:[%s125 + $0x10] sm:$0xf]
    %v131 = vld [vmem:[%s125 + $0x14] sm:$0xf]
    %s132 = scalar_lea.vmem %s3, 2
    %v133 = vld [vmem:[%s132] sm:$0x1]
    %v135 = vperm.slane %v133, 0
    %v143 = vunpack.c.l.b16 %v126
    %v144 = vunpack.c.l.b16 %v127
    %v145 = vunpack.c.l.b16 %v128
    %v146 = vunpack.c.l.b16 %v129
    %v147 = vunpack.c.l.b16 %v130
    %v148 = vunpack.c.l.b16 %v131
    %v149 = vpack.c.b16 %v144, %v143
    %v150 = vpack.c.b16 %v146, %v145
    %v151 = vpack.c.b16 %v148, %v147
    %155 = vmatpush.bf16.msra.mxu0 0
    %156 = vmatpush.bf16.msra.mxu0 0
    %157 = vmatpush.bf16.msra.mxu0 0
    %158 = vmatpush.bf16.msra.mxu0 0
    %159 = vmatpush.bf16.msra.mxu0 0
    %160 = vmatpush.bf16.msra.mxu0 %v151
    %161 = vmatpush.bf16.msra.mxu0 %v150
    %162 = vmatpush.bf16.msra.mxu0 %v149
    %163 = vmatmul.bf16.gmra.mxu0 %v67
    %v164 = vpop.f32.mrf.mxu0
    %v165 = vadd.f32 %v135, %v164
    %v166 = vpop.f32.mrf.mxu0
    %167 = vdwg.mxu0
    %s168 = scalar_lea.vmem %s2, 72
    %v169 = vld [vmem:[%s168] sm:$0xf]
    %v170 = vld [vmem:[%s168 + $0x4] sm:$0xf]
    %v171 = vld [vmem:[%s168 + $0x8] sm:$0xf]
    %v172 = vld [vmem:[%s168 + $0xc] sm:$0xf]
    %v173 = vld [vmem:[%s168 + $0x10] sm:$0xf]
    %v174 = vld [vmem:[%s168 + $0x14] sm:$0xf]
    %s175 = scalar_lea.vmem %s3, 3
    %v176 = vld [vmem:[%s175] sm:$0x1]
    %v178 = vperm.slane %v176, 0
    %v186 = vunpack.c.l.b16 %v169
    %v187 = vunpack.c.l.b16 %v170
    %v188 = vunpack.c.l.b16 %v171
    %v189 = vunpack.c.l.b16 %v172
    %v190 = vunpack.c.l.b16 %v173
    %v191 = vunpack.c.l.b16 %v174
    %v192 = vpack.c.b16 %v187, %v186
    %v193 = vpack.c.b16 %v189, %v188
    %v194 = vpack.c.b16 %v191, %v190
    %198 = vmatpush.bf16.msra.mxu0 0
    %199 = vmatpush.bf16.msra.mxu0 0
    %200 = vmatpush.bf16.msra.mxu0 0
    %201 = vmatpush.bf16.msra.mxu0 0
    %202 = vmatpush.bf16.msra.mxu0 0
    %203 = vmatpush.bf16.msra.mxu0 %v194
    %204 = vmatpush.bf16.msra.mxu0 %v193
    %205 = vmatpush.bf16.msra.mxu0 %v192
    %206 = vmatmul.bf16.gmra.mxu0 %v67
    %v207 = vpop.f32.mrf.mxu0
    %v208 = vadd.f32 %v178, %v207
    %v209 = vpop.f32.mrf.mxu0
    %210 = vdwg.mxu0
    %s211 = scalar_lea.vmem %s2, 96
    %v212 = vld [vmem:[%s211] sm:$0xf]
    %v213 = vld [vmem:[%s211 + $0x4] sm:$0xf]
    %v214 = vld [vmem:[%s211 + $0x8] sm:$0xf]
    %v215 = vld [vmem:[%s211 + $0xc] sm:$0xf]
    %v216 = vld [vmem:[%s211 + $0x10] sm:$0xf]
    %v217 = vld [vmem:[%s211 + $0x14] sm:$0xf]
    %s218 = scalar_lea.vmem %s3, 4
    %v219 = vld [vmem:[%s218] sm:$0x1]
    %v221 = vperm.slane %v219, 0
    %v229 = vunpack.c.l.b16 %v212
    %v230 = vunpack.c.l.b16 %v213
    %v231 = vunpack.c.l.b16 %v214
    %v232 = vunpack.c.l.b16 %v215
    %v233 = vunpack.c.l.b16 %v216
    %v234 = vunpack.c.l.b16 %v217
    %v235 = vpack.c.b16 %v230, %v229
    %v236 = vpack.c.b16 %v232, %v231
    %v237 = vpack.c.b16 %v234, %v233
    %241 = vmatpush.bf16.msra.mxu0 0
    %242 = vmatpush.bf16.msra.mxu0 0
    %243 = vmatpush.bf16.msra.mxu0 0
    %244 = vmatpush.bf16.msra.mxu0 0
    %245 = vmatpush.bf16.msra.mxu0 0
    %246 = vmatpush.bf16.msra.mxu0 %v237
    %247 = vmatpush.bf16.msra.mxu0 %v236
    %248 = vmatpush.bf16.msra.mxu0 %v235
    %249 = vmatmul.bf16.gmra.mxu0 %v67
    %v250 = vpop.f32.mrf.mxu0
    %v251 = vadd.f32 %v221, %v250
    %v252 = vpop.f32.mrf.mxu0
    %253 = vdwg.mxu0
    %vm254 = vcmask 261120
    %v255 = vsel %vm254, %v122, -inf
    %256 = vmax.xlane.f32.xlu0 %v255
    %v257 = vpop.xlane.xlu0 %256
    %v258 = vsel %vm254, %v165, -inf
    %259 = vmax.xlane.f32.xlu0 %v258
    %v260 = vpop.xlane.xlu0 %259
    %v261 = vsel %vm254, %v208, -inf
    %262 = vmax.xlane.f32.xlu0 %v261
    %v263 = vpop.xlane.xlu0 %262
    %v264 = vsel %vm254, %v251, -inf
    %265 = vmax.xlane.f32.xlu0 %v264
    %v266 = vpop.xlane.xlu0 %265
    %v267 = vsub.f32 %v122, %v257
    %v268 = vsub.f32 %v165, %v260
    %v269 = vsub.f32 %v208, %v263
    %v270 = vsub.f32 %v251, %v266
    %v271 = vmul.f32 %v267, 1.442695
    %v272 = vpow.pop %v271
    %v273 = vmul.f32 %v268, 1.442695
    %v274 = vpow.pop %v273
    %v275 = vmul.f32 %v269, 1.442695
    %v276 = vpow.pop %v275
    %v277 = vmul.f32 %v270, 1.442695
    %v278 = vpow.pop %v277
    %v279 = vsel %vm254, %v272, 0.0
    %280 = vadd.xlane.f32.xlu0 %v279
    %v281 = vpop.xlane.xlu0 %280
    %v282 = vsel %vm254, %v274, 0.0
    %283 = vadd.xlane.f32.xlu0 %v282
    %v284 = vpop.xlane.xlu0 %283
    %v285 = vsel %vm254, %v276, 0.0
    %286 = vadd.xlane.f32.xlu0 %v285
    %v287 = vpop.xlane.xlu0 %286
    %v288 = vsel %vm254, %v278, 0.0
    %289 = vadd.xlane.f32.xlu0 %v288
    %v290 = vpop.xlane.xlu0 %289
    %v291 = vld [vmem:[%s6] sm:$0xff]
    %v292 = vld [vmem:[%s6 + $0x8] sm:$0xff]
    %v293 = vld [vmem:[%s6 + $0x10] sm:$0xff]
    %v294 = vld [vmem:[%s6 + $0x18] sm:$0xff]
    %v296 = vsel %vm254, %v272, 0
    %v299 = vsel %vm254, %v274, 0
    %v302 = vsel %vm254, %v276, 0
    %v305 = vsel %vm254, %v278, 0
    %307 = vmatpush.msra.mxu0 0.0
    %308 = vmatpush.msra.mxu0 0.0
    %309 = vmatpush.msra.mxu0 0.0
    %310 = vmatpush.msra.mxu0 0.0
    %311 = vmatpush.msra.mxu0 0.0
    %312 = vmatpush.msra.mxu0 0.0
    %313 = vmatpush.msra.mxu0 0.0
    %314 = vmatpush.msra.mxu0 0.0
    %315 = vmatpush.msra.mxu0 0.0
    %316 = vmatpush.msra.mxu0 0.0
    %317 = vmatpush.msra.mxu0 0.0
    %318 = vmatpush.msra.mxu0 0.0
    %319 = vmatpush.msra.mxu0 %v294
    %320 = vmatpush.msra.mxu0 %v293
    %321 = vmatpush.msra.mxu0 %v292
    %322 = vmatpush.msra.mxu0 %v291
    %323 = vmatmul.f32.gmra.mxu0 %v296
    %v324 = vpop.f32.mrf.mxu0
    %v325 = vadd.f32 0.0, %v324
    %326 = vmatmul.f32.gmra.mxu0 %v299
    %v327 = vpop.f32.mrf.mxu0
    %v328 = vadd.f32 0.0, %v327
    %329 = vmatmul.f32.gmra.mxu0 %v302
    %v330 = vpop.f32.mrf.mxu0
    %v331 = vadd.f32 0.0, %v330
    %332 = vmatmul.f32.gmra.mxu0 %v305
    %v333 = vpop.f32.mrf.mxu0
    %v334 = vadd.f32 0.0, %v333
    %335 = vdwg.mxu0
    %v336 = vrcp.pop %v281
    %v337 = vrcp.pop %v284
    %v338 = vrcp.pop %v287
    %v339 = vrcp.pop %v290
    %v340 = vmul.f32 %v325, %v336
    %v341 = vmul.f32 %v328, %v337
    %v342 = vmul.f32 %v331, %v338
    %v343 = vmul.f32 %v334, %v339
    %v344 = vsub.f32 1.0, %v340
    %v345 = vsub.f32 1.0, %v342
    %v346 = vtanh.pop %v79
    %v347 = vmul.f32 %v343, %v345
    %v348 = vsub.f32 %v343, %v347
    %v349 = vsub.f32 %v345, %v347
    %v350 = vmul.f32 %v341, %v344
    %v351 = vsub.f32 %v341, %v350
    %v352 = vsub.f32 %v344, %v350
    %v353 = vmul.f32 %v350, %v36
    %v354 = vmul.f32 %v347, %v346
    %v355 = vadd.f32 %v353, %v354
    %v356 = vmul.f32 %v351, %v36
    %v357 = vmul.f32 %v348, %v346
    %v358 = vadd.f32 %v356, %v357
    %v359 = vadd.f32 %v358, %v355
    %v360 = vmul.f32 %v352, %v36
    %v361 = vmul.f32 %v349, %v346
    %v362 = vadd.f32 %v360, %v361
    %v363 = vadd.f32 %v362, %v355
    %v364 = vtanh.pop %v359
    %365 = vst.msk [vmem:[#allocation7] sm:$0xff] %vm254, %v364
    %v366 = vtanh.pop %v363
    %367 = vst.msk [vmem:[#allocation6] sm:$0xff] %vm254, %v366
    %v368 = vtanh.pop %v355
    %369 = vst.msk [vmem:[#allocation9] sm:$0xff] %vm254, %v368
    %v370 = vpack.c.bf16 %v359, %v359
    %v371 = vld [vmem:[%s4] sm:$0xf]
    %v372 = vld [vmem:[%s4 + $0x4] sm:$0xf]
    %v373 = vld [vmem:[%s4 + $0x8] sm:$0xf]
    %v374 = vld [vmem:[%s4 + $0xc] sm:$0xf]
    %v375 = vpack.c.bf16 %v363, %v363
    %s376 = scalar_lea.vmem %s4, 16
    %v377 = vld [vmem:[%s376] sm:$0xf]
    %v378 = vld [vmem:[%s376 + $0x4] sm:$0xf]
    %v379 = vld [vmem:[%s376 + $0x8] sm:$0xf]
    %v380 = vld [vmem:[%s376 + $0xc] sm:$0xf]
    %v385 = vunpack.c.l.b16 %v377
    %v386 = vunpack.c.l.b16 %v378
    %v387 = vunpack.c.l.b16 %v379
    %v388 = vunpack.c.l.b16 %v380
    %v389 = vpack.c.b16 %v386, %v385
    %v390 = vpack.c.b16 %v388, %v387
    %v394 = vsel %vm254, %v375, 0
    %396 = vmatpush.bf16.msra.mxu0 0
    %397 = vmatpush.bf16.msra.mxu0 0
    %398 = vmatpush.bf16.msra.mxu0 0
    %399 = vmatpush.bf16.msra.mxu0 0
    %400 = vmatpush.bf16.msra.mxu0 0
    %401 = vmatpush.bf16.msra.mxu0 0
    %402 = vmatpush.bf16.msra.mxu0 %v390
    %403 = vmatpush.bf16.msra.mxu0 %v389
    %404 = vmatmul.bf16.gmra.mxu0 %v394
    %v405 = vpop.f32.mrf.mxu0
    %v406 = vadd.f32 0.0, %v405
    %v407 = vpop.f32.mrf.mxu0
    %408 = vdwg.mxu0
    %v413 = vunpack.c.l.b16 %v371
    %v414 = vunpack.c.l.b16 %v372
    %v415 = vunpack.c.l.b16 %v373
    %v416 = vunpack.c.l.b16 %v374
    %v417 = vpack.c.b16 %v414, %v413
    %v418 = vpack.c.b16 %v416, %v415
    %v422 = vsel %vm254, %v370, 0
    %424 = vmatpush.bf16.msra.mxu0 0
    %425 = vmatpush.bf16.msra.mxu0 0
    %426 = vmatpush.bf16.msra.mxu0 0
    %427 = vmatpush.bf16.msra.mxu0 0
    %428 = vmatpush.bf16.msra.mxu0 0
    %429 = vmatpush.bf16.msra.mxu0 0
    %430 = vmatpush.bf16.msra.mxu0 %v418
    %431 = vmatpush.bf16.msra.mxu0 %v417
    %432 = vmatmul.bf16.gmra.mxu0 %v422
    %v433 = vpop.f32.mrf.mxu0
    %v434 = vadd.f32 %v406, %v433
    %v435 = vpop.f32.mrf.mxu0
    %436 = vdwg.mxu0
    %v437 = vpack.c.bf16 %v355, %v355
    %s438 = scalar_lea.vmem %s4, 32
    %v439 = vld [vmem:[%s438] sm:$0xf]
    %v440 = vld [vmem:[%s438 + $0x4] sm:$0xf]
    %v441 = vld [vmem:[%s438 + $0x8] sm:$0xf]
    %v442 = vld [vmem:[%s438 + $0xc] sm:$0xf]
    %v447 = vunpack.c.l.b16 %v439
    %v448 = vunpack.c.l.b16 %v440
    %v449 = vunpack.c.l.b16 %v441
    %v450 = vunpack.c.l.b16 %v442
    %v451 = vpack.c.b16 %v448, %v447
    %v452 = vpack.c.b16 %v450, %v449
    %v456 = vsel %vm254, %v437, 0
    %458 = vmatpush.bf16.msra.mxu0 0
    %459 = vmatpush.bf16.msra.mxu0 0
    %460 = vmatpush.bf16.msra.mxu0 0
    %461 = vmatpush.bf16.msra.mxu0 0
    %462 = vmatpush.bf16.msra.mxu0 0
    %463 = vmatpush.bf16.msra.mxu0 0
    %464 = vmatpush.bf16.msra.mxu0 %v452
    %465 = vmatpush.bf16.msra.mxu0 %v451
    %466 = vmatmul.bf16.gmra.mxu0 %v456
    %v467 = vpop.f32.mrf.mxu0
    %v468 = vadd.f32 0.0, %v467
    %v469 = vpop.f32.mrf.mxu0
    %470 = vdwg.mxu0
    %v471 = vadd.f32 %v434, %v468
    %v472 = vld [vmem:[%s5] sm:$0x1]
    %v474 = vperm.slane %v472, 0
    %v476 = vadd.f32 %v471, %v474
    %477 = vst.msk [vmem:[#allocation4] sm:$0xff] %vm254, %v476
    %v478 = vtanh.pop %v476
    %479 = vst.msk [vmem:[#allocation2] sm:$0xff] %vm254, %v478
    // Predicated region
    $region30: #{tpu_custom_call.1} parent=1 // pred_check
      _
    $region31: #{tpu_custom_call.1} parent=1 // pred_check_branch
      %481 = sbr.rel (0) target = $region33
    $region32: #{tpu_custom_call.1} parent=1 // pred_region
      %483 = vsyncadd [#allocation3], 0
      %s485 = sshll.u32 [#allocation2], 4
      %s486 = int_to_ptr.vmem [resolvable:$true] %s485
      %s487 = sshll.u32 %s7, 4
      %s488 = int_to_ptr.hbm [resolvable:$true] %s487
      %490 = dma.vmem_to_hbm [thread:$0]  %s486, 128, %s488, [#allocation3]
    $region33: #{tpu_custom_call.1} parent=1 // pred_fallthru
      _
    // Predicated region
    $region34: #{tpu_custom_call.1} parent=1 // pred_check
      _
    $region35: #{tpu_custom_call.1} parent=1 // pred_check_branch
      %492 = sbr.rel (0) target = $region37
    $region36: #{tpu_custom_call.1} parent=1 // pred_region
      %494 = vsyncadd [#allocation5], 0
      %s496 = sshll.u32 [#allocation4], 4
      %s497 = int_to_ptr.vmem [resolvable:$true] %s496
      %s498 = sshll.u32 %s8, 4
      %s499 = int_to_ptr.hbm [resolvable:$true] %s498
      %501 = dma.vmem_to_hbm [thread:$0]  %s497, 128, %s499, [#allocation5]
    $region37: #{tpu_custom_call.1} parent=1 // pred_fallthru
      _
    // Predicated region
    $region38: #{tpu_custom_call.1} parent=1 // pred_check
      _
    $region39: #{tpu_custom_call.1} parent=1 // pred_check_branch
      %503 = sbr.rel (0) target = $region41
    $region40: #{tpu_custom_call.1} parent=1 // pred_region
      %505 = vsyncadd [#allocation5], 0
      %s507 = sshll.u32 [#allocation6], 4
      %s508 = int_to_ptr.vmem [resolvable:$true] %s507
      %s509 = sshll.u32 %s9, 4
      %s510 = int_to_ptr.hbm [resolvable:$true] %s509
      %512 = dma.vmem_to_hbm [thread:$0]  %s508, 128, %s510, [#allocation5]
    $region41: #{tpu_custom_call.1} parent=1 // pred_fallthru
      _
    // Predicated region
    $region42: #{tpu_custom_call.1} parent=1 // pred_check
      _
    $region43: #{tpu_custom_call.1} parent=1 // pred_check_branch
      %514 = sbr.rel (0) target = $region45
    $region44: #{tpu_custom_call.1} parent=1 // pred_region
      %516 = vsyncadd [#allocation8], 0
      %s518 = sshll.u32 [#allocation7], 4
      %s519 = int_to_ptr.vmem [resolvable:$true] %s518
      %s520 = sshll.u32 %s10, 4
      %s521 = int_to_ptr.hbm [resolvable:$true] %s520
      %523 = dma.vmem_to_hbm [thread:$0]  %s519, 128, %s521, [#allocation8]
    $region45: #{tpu_custom_call.1} parent=1 // pred_fallthru
      _
    // Predicated region
    $region46: #{tpu_custom_call.1} parent=1 // pred_check
      _
    $region47: #{tpu_custom_call.1} parent=1 // pred_check_branch
      %525 = sbr.rel (0) target = $region49
    $region48: #{tpu_custom_call.1} parent=1 // pred_region
      %527 = vsyncadd [#allocation8], 0
      %s529 = sshll.u32 [#allocation9], 4
      %s530 = int_to_ptr.vmem [resolvable:$true] %s529
      %s531 = sshll.u32 %s11, 4
      %s532 = int_to_ptr.hbm [resolvable:$true] %s531
      %534 = dma.vmem_to_hbm [thread:$0]  %s530, 128, %s532, [#allocation8]
    $region49: #{tpu_custom_call.1} parent=1 // pred_fallthru
      _
    // Predicated region
    $region50: #{tpu_custom_call.1} parent=1 // pred_check
      _
    $region51: #{tpu_custom_call.1} parent=1 // pred_check_branch
      %536 = sbr.rel (0) target = $region53
    $region52: #{tpu_custom_call.1} parent=1 // pred_region
      %538 = dma.done [#allocation3], 128
    $region53: #{tpu_custom_call.1} parent=1 // pred_fallthru
      _
    // Predicated region
    $region54: #{tpu_custom_call.1} parent=1 // pred_check
      _
    $region55: #{tpu_custom_call.1} parent=1 // pred_check_branch
      %540 = sbr.rel (0) target = $region57
    $region56: #{tpu_custom_call.1} parent=1 // pred_region
      %542 = dma.done [#allocation5], 128
    $region57: #{tpu_custom_call.1} parent=1 // pred_fallthru
      _
    // Predicated region
    $region58: #{tpu_custom_call.1} parent=1 // pred_check
      _
    $region59: #{tpu_custom_call.1} parent=1 // pred_check_branch
      %544 = sbr.rel (0) target = $region61
    $region60: #{tpu_custom_call.1} parent=1 // pred_region
      %546 = dma.done [#allocation5], 128
    $region61: #{tpu_custom_call.1} parent=1 // pred_fallthru
      _
    // Predicated region
    $region62: #{tpu_custom_call.1} parent=1 // pred_check
      _
    $region63: #{tpu_custom_call.1} parent=1 // pred_check_branch
      %548 = sbr.rel (0) target = $region65
    $region64: #{tpu_custom_call.1} parent=1 // pred_region
      %550 = dma.done [#allocation8], 128
    $region65: #{tpu_custom_call.1} parent=1 // pred_fallthru
      _
    // Predicated region
    $region66: #{tpu_custom_call.1} parent=1 // pred_check
      _
    $region67: #{tpu_custom_call.1} parent=1 // pred_check_branch
      %552 = sbr.rel (0) target = $region69
    $region68: #{tpu_custom_call.1} parent=1 // pred_region
      %554 = dma.done [#allocation8], 128
    $region69: #{tpu_custom_call.1} parent=1 // pred_fallthru
      _
    %555 = vsyncpa [#allocation3], 1
    %556 = vsyncpa [#allocation5], 1
    %557 = vsyncpa [#allocation8], 1

</llo_original>
